<compile_context>
chip_gen: v7x
topology: tpu7x:2x2x1
jax: 0.10.0
libtpu: 0.0.40
codegen_flags: <defaults>
</compile_context>

<pallas_src>
import jax
import jax.numpy as jnp
from jax.experimental import pallas as pl
from jax.experimental.pallas import tpu as pltpu


def _hiaml_out_kernel(x_ref, wt_ref, b_ref, o_ref, acc_ref):
    # x_ref  : (n_blk, C, hw_blk)  native dtype, NCHW-flat (HW on lanes)
    # wt_ref : (C, nc_pad) f32     grid-invariant, already scaled by 1/HW
    # b_ref  : (1, nc_pad) f32     grid-invariant
    # o_ref  : (n_blk, nc_pad) f32 written only on the last hw step
    # acc_ref: (n_blk, C) f32      VMEM pooled-sum accumulator
    hw_idx = pl.program_id(1)

    @pl.when(hw_idx == 0)
    def _():
        acc_ref[...] = jnp.zeros_like(acc_ref)

    # Partial global-average-pool: sum over the HW (lane) axis in f32.
    # Cross-lane reduce -> XLU slot (free; kernel is DMA bound).
    x = x_ref[...].astype(jnp.float32)            # (n_blk, C, hw_blk)
    acc_ref[...] += jnp.sum(x, axis=-1)           # (n_blk, C)

    @pl.when(hw_idx == pl.num_programs(1) - 1)
    def _():
        # 1/HW already folded into wt, so the pooled sum feeds the MXU directly.
        logits = jnp.dot(acc_ref[...], wt_ref[...],
                         preferred_element_type=jnp.float32)
        o_ref[...] = (logits + b_ref[...]).astype(o_ref.dtype)


def _round_up(a, b):
    return ((a + b - 1) // b) * b


def _largest_divisor(total, cap, step):
    """Largest divisor of `total` that is a multiple of `step` and <= cap.
    Returns 0 if none exists."""
    cand = (min(total, cap) // step) * step
    while cand >= step:
        if total % cand == 0:
            return cand
        cand -= step
    return 0


def _default_block_bytes():
    """Per-buffer x-block budget, sized per TPU generation."""
    try:
        kind = jax.devices()[0].device_kind.lower()
    except Exception:  # pragma: no cover - CPU / unknown backend
        return 6 << 20
    if "v5 lite" in kind or "v5e" in kind or "v5lite" in kind:
        return 4 << 20      # stay inside v5e's 16 MiB default scoped VMEM
    if "v6" in kind:
        return 12 << 20     # v6e: 128 MiB VMEM, raise scope explicitly
    return 6 << 20          # v7x / unknown: headroom under 64 MiB physical


def hiaml_out_net(x_nchw, weight, bias, *, x_block_bytes=None):
    """HiAMLOutNet forward: global average pool (NCHW) + linear classifier.

    x_nchw: (N, C, H, W), any float dtype (kept native; f32 accumulation).
    weight: (n_classes, C); bias: (n_classes,)   (PyTorch Linear layout).
    Returns logits (N, n_classes) float32.
    """
    N, C, H, W = x_nchw.shape
    n_classes = weight.shape[0]
    HW = H * W

    if x_block_bytes is None:
        x_block_bytes = _default_block_bytes()

    # NCHW consumed natively: pure metadata reshape, no HBM transpose.
    x3 = x_nchw.reshape(N, C, HW)

    itemsize = jnp.dtype(x3.dtype).itemsize
    sub_step = {4: 8, 2: 16, 1: 32}.get(itemsize, 8)   # dtype-aware sublanes
    C_pad = _round_up(C, sub_step)                     # VMEM sublane padding

    # Lane-dense padded classifier slab (unmasked stores); fold 1/HW into wt.
    nc_pad = _round_up(max(n_classes, 1), 128)
    wt = jnp.zeros((C, nc_pad), jnp.float32).at[:, :n_classes].set(
        weight.astype(jnp.float32).T * (1.0 / HW))
    b2 = jnp.zeros((1, nc_pad), jnp.float32).at[:, :n_classes].set(
        bias.astype(jnp.float32))

    # --- Batch tile ---------------------------------------------------------
    # Bounded by the per-buffer budget (lane-padding aware: even a 128-lane
    # sliver costs n_blk * C_pad * 128 * itemsize), capped at 256 rows, and
    # forced to give >= 2 blocks when N >= 16 so megacore has work to shard.
    row_bytes = C_pad * 128 * itemsize
    max_n_budget = max(8, (x_block_bytes // row_bytes // 8) * 8)
    if N % 8 == 0:
        cap = min(256, max_n_budget)
        if N >= 16:
            cap = min(cap, max(8, (N // 2 // 8) * 8))
        n_blk = _largest_divisor(N, cap, 8) or N
    else:
        # TODO(synk): very large non-8-divisible batches would need zero
        # padding of N; typical batches are 8-divisible or tiny.
        n_blk = N
    grid_n = N // n_blk

    # --- HW tile ------------------------------------------------------------
    # Multiple of 128 lanes within the per-buffer budget; prefer an exact
    # divisor of HW, otherwise zero-pad HW (zeros don't change the sum and
    # 1/HW above uses the true HW).
    hw_budget = max(1, x_block_bytes // (n_blk * C_pad * itemsize))
    max_hw_blk = max(128, (hw_budget // 128) * 128)
    if max_hw_blk >= HW:
        hw_blk, HW_total = HW, HW
    else:
        d = _largest_divisor(HW, max_hw_blk, 128)
        if d:
            hw_blk, HW_total = d, HW
        else:
            hw_blk = max_hw_blk
            HW_total = _round_up(HW, hw_blk)
            x3 = jnp.pad(x3, ((0, 0), (0, 0), (0, HW_total - HW)))
    grid_hw = HW_total // hw_blk

    # --- Explicit scoped-VMEM limit from the real (padded) footprint --------
    x_blk_vmem = n_blk * C_pad * _round_up(hw_blk, 128) * itemsize
    wt_vmem = _round_up(C, 8) * nc_pad * 4
    b_vmem = 8 * nc_pad * 4
    out_vmem = _round_up(n_blk, 8) * nc_pad * 4
    acc_vmem = _round_up(n_blk, 8) * _round_up(C, 128) * 4
    footprint = 2 * x_blk_vmem + 2 * (wt_vmem + b_vmem + out_vmem) + acc_vmem
    vmem_limit = int(min(48 << 20,
                         max(16 << 20, footprint + footprint // 4 + (2 << 20))))

    out_pad = pl.pallas_call(
        _hiaml_out_kernel,
        out_shape=jax.ShapeDtypeStruct((N, nc_pad), jnp.float32),
        grid=(grid_n, grid_hw),
        in_specs=[
            # x: tiled over (N, HW); channels always full (sublane axis).
            pl.BlockSpec((n_blk, C, hw_blk), lambda n, h: (n, 0, h)),
            # weight / bias: grid-invariant -> DMA'd once, stay VMEM resident.
            pl.BlockSpec((C, nc_pad), lambda n, h: (0, 0)),
            pl.BlockSpec((1, nc_pad), lambda n, h: (0, 0)),
        ],
        out_specs=pl.BlockSpec((n_blk, nc_pad), lambda n, h: (n, 0)),
        scratch_shapes=[pltpu.VMEM((n_blk, C), jnp.float32)],
        compiler_params=pltpu.CompilerParams(
            dimension_semantics=("parallel", "arbitrary"),
            vmem_limit_bytes=vmem_limit),
    )(x3, wt, b2)

    return out_pad[:, :n_classes]


if __name__ == "__main__":
    # Small shapes consistent with the module: batch=2, C_in=4, spatial=16x16,
    # n_classes=8.
    N, C_in, H, W, n_classes = 2, 4, 16, 16, 8

    key = jax.random.PRNGKey(0)
    kx, kw, kb = jax.random.split(key, 3)

    x = jax.random.normal(kx, (N, C_in, H, W), dtype=jnp.float32)
    # PyTorch Linear shapes: weight (n_classes, C_in), bias (n_classes,).
    weight = jax.random.normal(kw, (n_classes, C_in), dtype=jnp.float32) * 0.1
    bias = jax.random.normal(kb, (n_classes,), dtype=jnp.float32) * 0.1

    logits = hiaml_out_net(x, weight, bias)
    logits = jax.block_until_ready(logits)

    # Reference check in plain JAX (same math as the PyTorch forward).
    pooled_ref = jnp.mean(x.astype(jnp.float32), axis=(2, 3))      # (N, C_in)
    logits_ref = pooled_ref @ weight.T.astype(jnp.float32) + bias  # (N, n_cls)
    assert jnp.allclose(logits, logits_ref, atol=1e-5, rtol=1e-5)

    print("KERNEL_OK")
</pallas_src>

<mosaic_0001>
module attributes {stable_mosaic.version = 11 : i64} {
  func.func @_hiaml_out_kernel(%arg0: i32, %arg1: i32, %arg2: memref<2x4x256xf32, #tpu.memory_space<vmem>>, %arg3: memref<4x128xf32, #tpu.memory_space<vmem>>, %arg4: memref<1x128xf32, #tpu.memory_space<vmem>>, %arg5: memref<2x128xf32, #tpu.memory_space<vmem>>, %arg6: memref<2x4xf32, #tpu.memory_space<vmem>>) attributes {dimension_semantics = [#tpu.dimension_semantics<parallel>, #tpu.dimension_semantics<arbitrary>], iteration_bounds = array<i64: 1, 1>, scalar_prefetch = 0 : i64, scratch_operands = 1 : i64, tpu.core_type = #tpu.core_type<tc>, window_params = [{transform_indices = @transform_0, window_bounds = array<i64: 2, 4, 256>}, {pipeline_mode = #tpu.pipeline_mode<synchronous>, transform_indices = @transform_1, window_bounds = array<i64: 4, 128>}, {pipeline_mode = #tpu.pipeline_mode<synchronous>, transform_indices = @transform_2, window_bounds = array<i64: 1, 128>}, {transform_indices = @transform_3, window_bounds = array<i64: 2, 128>}]} {
    %c0_i32 = arith.constant 0 : i32
    %0 = arith.cmpi eq, %arg1, %c0_i32 : i32
    %1 = arith.extui %0 : i1 to i32
    %c0_i32_0 = arith.constant 0 : i32
    %2 = arith.cmpi ne, %1, %c0_i32_0 : i32
    scf.if %2 {
      %cst_9 = arith.constant 0.000000e+00 : f32
      %11 = vector.broadcast %cst_9 : f32 to vector<2x4xf32>
      %c0_10 = arith.constant 0 : index
      %c0_11 = arith.constant 0 : index
      %12 = vector.load %arg6[%c0_10, %c0_11] : memref<2x4xf32, #tpu.memory_space<vmem>>, vector<2x4xf32>
      tpu.vector_store %arg6[%c0_10, %c0_11], %11 {strides = array<i32>} : memref<2x4xf32, #tpu.memory_space<vmem>>, vector<2x4xf32>,
    } else {
    }
    %c0 = arith.constant 0 : index
    %c0_1 = arith.constant 0 : index
    %c0_2 = arith.constant 0 : index
    %3 = vector.load %arg2[%c0, %c0_1, %c0_2] : memref<2x4x256xf32, #tpu.memory_space<vmem>>, vector<2x4x256xf32>
    %c0_3 = arith.constant 0 : index
    %c0_4 = arith.constant 0 : index
    %4 = vector.load %arg6[%c0_3, %c0_4] : memref<2x4xf32, #tpu.memory_space<vmem>>, vector<2x4xf32>
    %cst = arith.constant dense<0.000000e+00> : vector<2x4xf32>
    %5 = vector.multi_reduction <add>, %3, %cst [2] : vector<2x4x256xf32> to vector<2x4xf32>
    %6 = arith.addf %4, %5 : vector<2x4xf32>
    %c0_5 = arith.constant 0 : index
    %c0_6 = arith.constant 0 : index
    %7 = vector.load %arg6[%c0_5, %c0_6] : memref<2x4xf32, #tpu.memory_space<vmem>>, vector<2x4xf32>
    tpu.vector_store %arg6[%c0_5, %c0_6], %6 {strides = array<i32>} : memref<2x4xf32, #tpu.memory_space<vmem>>, vector<2x4xf32>,
    %c0_i32_7 = arith.constant 0 : i32
    %8 = arith.cmpi eq, %arg1, %c0_i32_7 : i32
    %9 = arith.extui %8 : i1 to i32
    %c0_i32_8 = arith.constant 0 : i32
    %10 = arith.cmpi ne, %9, %c0_i32_8 : i32
    scf.if %10 {
      %c0_9 = arith.constant 0 : index
      %c0_10 = arith.constant 0 : index
      %11 = vector.load %arg6[%c0_9, %c0_10] : memref<2x4xf32, #tpu.memory_space<vmem>>, vector<2x4xf32>
      %c0_11 = arith.constant 0 : index
      %c0_12 = arith.constant 0 : index
      %12 = vector.load %arg3[%c0_11, %c0_12] : memref<4x128xf32, #tpu.memory_space<vmem>>, vector<4x128xf32>
      %cst_13 = arith.constant dense<0.000000e+00> : vector<2x128xf32>
      %13 = tpu.matmul %11, %12, %cst_13 {dimension_numbers = #tpu.dot_dimension_numbers<[1], [0], [0], [1], [0, 0, 1, 1], [], []>} : vector<2x4xf32>, vector<4x128xf32>, vector<2x128xf32> -> vector<2x128xf32>
      %c0_14 = arith.constant 0 : index
      %c0_15 = arith.constant 0 : index
      %14 = vector.load %arg4[%c0_14, %c0_15] : memref<1x128xf32, #tpu.memory_space<vmem>>, vector<1x128xf32>
      %15 = vector.broadcast %14 : vector<1x128xf32> to vector<2x128xf32>
      %16 = arith.addf %13, %15 : vector<2x128xf32>
      %c0_16 = arith.constant 0 : index
      %c0_17 = arith.constant 0 : index
      %17 = vector.load %arg5[%c0_16, %c0_17] : memref<2x128xf32, #tpu.memory_space<vmem>>, vector<2x128xf32>
      tpu.vector_store %arg5[%c0_16, %c0_17], %16 {strides = array<i32>} : memref<2x128xf32, #tpu.memory_space<vmem>>, vector<2x128xf32>,
    } else {
    }
    return
  }
  func.func @transform_0(%arg0: i32, %arg1: i32) -> (i32, i32, i32) {
    %c0_i32 = arith.constant 0 : i32
    %c0_i32_0 = arith.constant 0 : i32
    return %arg0, %c0_i32, %arg1 : i32, i32, i32
  }
  func.func @transform_1(%arg0: i32, %arg1: i32) -> (i32, i32) {
    %c0_i32 = arith.constant 0 : i32
    %c0_i32_0 = arith.constant 0 : i32
    %c0_i32_1 = arith.constant 0 : i32
    return %c0_i32, %c0_i32_0 : i32, i32
  }
  func.func @transform_2(%arg0: i32, %arg1: i32) -> (i32, i32) {
    %c0_i32 = arith.constant 0 : i32
    %c0_i32_0 = arith.constant 0 : i32
    %c0_i32_1 = arith.constant 0 : i32
    return %c0_i32, %c0_i32_0 : i32, i32
  }
  func.func @transform_3(%arg0: i32, %arg1: i32) -> (i32, i32) {
    %c0_i32 = arith.constant 0 : i32
    %c0_i32_0 = arith.constant 0 : i32
    return %arg0, %c0_i32 : i32, i32
  }
}

</mosaic_0001>

<llo_original>
// kernel: tpu_custom_call.1
$region0: #{tpu_custom_call.1}
  #allocation0 [shape = 'u32[]', space=smem, size = 0x4, offset = 0x4, fixed_abs, tag = 'smem constant byte address 0x4 - core index']
  #allocation1 [shape = 'u32[144,128]{1,0:T(1,128)}', space=vmem, size = 0x12000, scoped, tag = 'internal scratch']
  #allocation2 [shape = 'f32[2,4]{1,0:T(2,128)}', space=vmem, size = 0x400, scoped, tag = 'scratch operand']
  %s0 = inlined_call_operand.hbm [shape: f32[2,4,256], index: 0, kind: input, shape index: {}]
  %s1 = inlined_call_operand.hbm [shape: f32[4,128], index: 1, kind: input, shape index: {}]
  %s2 = inlined_call_operand.vmem [shape: f32[1,128], index: 2, kind: input, shape index: {}]
  %s3 = inlined_call_operand.hbm [shape: f32[2,128], index: 3, kind: output, shape index: {}]
  %s4 = sld [smem:[#allocation0]]
  $region38: #{tpu_custom_call.1} parent=0
    _
  %s6 = ssub.s32 1, %s4
  %s7 = scalar_select 0, %s6, %s4
  $region1: #{tpu_custom_call.1} parent=0
    #allocation3 [shape = 'u8[8192]{0}', space=vmem, size = 0x2000, scoped, tag = 'input window, operand 0, single buffered']
    #allocation4 [shape = 's32[1]{0}', space=sflag, size = 0x4, scoped, tag = 'scoped memory for tpu_custom_call.1']
    #allocation5 [shape = 's32[1]{0}', space=sflag, size = 0x4, scoped, tag = 'scoped memory for tpu_custom_call.1']
    #allocation6 [shape = 'u8[2048]{0}', space=vmem, size = 0x800, scoped, tag = 'input window, operand 1, single buffered']
    #allocation7 [shape = 's32[1]{0}', space=sflag, size = 0x4, scoped, tag = 'scoped memory for tpu_custom_call.1']
    #allocation8 [shape = 'u8[1024]{0}', space=vmem, size = 0x400, scoped, tag = 'output window, operand 0, single buffered']
    %8 = vsyncpa [#allocation4], 0
    %9 = vsyncpa [#allocation7], 0
    %10 = vsyncpa [#allocation5], 0
    // Predicated region
    $region2: #{tpu_custom_call.1} parent=1 // pred_check
      _
    $region3: #{tpu_custom_call.1} parent=1 // pred_check_branch
      %12 = sbr.rel (0) target = $region5
    $region4: #{tpu_custom_call.1} parent=1 // pred_region
      %s14 = ssub.s32 256, 256
      %15 = vsyncadd [#allocation4], %s14
      %s16 = sshll.u32 [#allocation3], 4
      %s17 = int_to_ptr.vmem [resolvable:$true] %s16
      %22 = dma.hbm_to_vmem [thread:$0]  %s0, 256, %s17, [#allocation4], 128, 128, 8
    $region5: #{tpu_custom_call.1} parent=1 // pred_fallthru
      _
    // Predicated region
    $region6: #{tpu_custom_call.1} parent=1 // pred_check
      _
    $region7: #{tpu_custom_call.1} parent=1 // pred_check_branch
      %24 = sbr.rel (0) target = $region9
    $region8: #{tpu_custom_call.1} parent=1 // pred_region
      %s26 = ssub.s32 64, 64
      %27 = vsyncadd [#allocation7], %s26
      %s29 = sshll.u32 [#allocation6], 4
      %s30 = int_to_ptr.vmem [resolvable:$true] %s29
      %32 = dma.hbm_to_vmem [thread:$0]  %s1, 64, %s30, [#allocation7]
    $region9: #{tpu_custom_call.1} parent=1 // pred_fallthru
      _
    // Predicated region
    $region10: #{tpu_custom_call.1} parent=1 // pred_check
      _
    $region11: #{tpu_custom_call.1} parent=1 // pred_check_branch
      %34 = sbr.rel (0) target = $region13
    $region12: #{tpu_custom_call.1} parent=1 // pred_region
      _
    $region13: #{tpu_custom_call.1} parent=1 // pred_fallthru
      _
    // Predicated region
    $region14: #{tpu_custom_call.1} parent=1 // pred_check
      _
    $region15: #{tpu_custom_call.1} parent=1 // pred_check_branch
      %36 = sbr.rel (0) target = $region17
    $region16: #{tpu_custom_call.1} parent=1 // pred_region
      %37 = dma.done [#allocation4], 256
    $region17: #{tpu_custom_call.1} parent=1 // pred_fallthru
      _
    // Predicated region
    $region18: #{tpu_custom_call.1} parent=1 // pred_check
      _
    $region19: #{tpu_custom_call.1} parent=1 // pred_check_branch
      %39 = sbr.rel (0) target = $region21
    $region20: #{tpu_custom_call.1} parent=1 // pred_region
      %40 = dma.done [#allocation7], 64
    $region21: #{tpu_custom_call.1} parent=1 // pred_fallthru
      _
    %p41 = scmp.eq.s32.totalorder 0, 0
    // Predicated region
    $region22: #{tpu_custom_call.1} parent=1 // pred_check
      %p42 = pneg %p41
    $region23: #{tpu_custom_call.1} parent=1 // pred_check_branch
      %44 = sbr.rel (%p42) target = $region25
    $region24: #{tpu_custom_call.1} parent=1 // pred_region
      %vm45 = vcmask 25600
      %46 = vst.msk [vmem:[#allocation2] sm:$0x3] %vm45, 0.0
    $region25: #{tpu_custom_call.1} parent=1 // pred_fallthru
      _
    %v47 = vld [vmem:[#allocation3] sm:$0xff]
    %v48 = vld [vmem:[#allocation3 + $0x8] sm:$0xff]
    %v49 = vld [vmem:[#allocation2] sm:$0x3]
    %v52 = vcombine.high %v47, %v47
    %v53 = vcombine.high %v48, %v48
    %vm56 = vcmask 1043456
    %v57 = vsel %vm56, %v47, 0.0
    %v58 = vsel %vm56, %v52, 0.0
    %v59 = vadd.f32 %v57, %v58
    %60 = vadd.xlane.f32.xlu0 %v59
    %v61 = vpop.xlane.xlu0 %60
    %v62 = vsel %vm56, %v48, 0.0
    %v63 = vsel %vm56, %v53, 0.0
    %v64 = vadd.f32 %v62, %v63
    %65 = vadd.xlane.f32.xlu0 %v64
    %v66 = vpop.xlane.xlu0 %65
    %v69 = vlaneseq
    %v70 = vand.u32 %v69, 127
    %v71 = vlaneseq
    %v72 = vshrl.u32 %v71, 7
    %v73 = vsub.s32 %v70, %v72
    %v74 = vrot.slane %v61, %v73
    %v75 = vlaneseq
    %v76 = vshrl.u32 %v75, 7
    %v77 = vsub.s32 %v70, %v76
    %v78 = vrot.slane %v66, %v77
    %vm79 = vcmask 1041409
    %v80 = vsel %vm79, %v78, %v74
    %v82 = vadd.f32 %v49, %v80
    %vm83 = vcmask 25600
    %84 = vst.msk [vmem:[#allocation2] sm:$0x3] %vm83, %v82
    // Predicated region
    $region26: #{tpu_custom_call.1} parent=1 // pred_check
      %p85 = pneg %p41
    $region27: #{tpu_custom_call.1} parent=1 // pred_check_branch
      %87 = sbr.rel (%p85) target = $region29
    $region28: #{tpu_custom_call.1} parent=1 // pred_region
      %v88 = vld [vmem:[#allocation2] sm:$0x3]
      %v89 = vld [vmem:[#allocation6] sm:$0xf]
      %v90 = vld [vmem:[%s2] sm:$0x1]
      %v92 = vlaneseq
      %v93 = vshrl.u32 %v92, 7
      %v94 = vsub.s32 0, %v93
      %v95 = vrot.slane %v90, %v94
      %vm97 = vcmask 31744
      %v99 = vsel %vm97, %v88, 0
      %v102 = vsel %vm56, %v89, 0
      %104 = vmatprep.subr.mxu0 0.0
      %105 = vmatpush1.msra.mxu0 %v102
      %106 = vmatprep.subr.mxu0 0.0
      %107 = vmatpush1.msra.mxu0 0.0
      %108 = vmatprep.subr.mxu0 0.0
      %109 = vmatpush1.msra.mxu0 0.0
      %110 = vmatprep.subr.mxu0 0.0
      %111 = vmatpush1.msra.mxu0 0.0
      %112 = vmatprep.subr.mxu0 0.0
      %113 = vmatpush1.msra.mxu0 0.0
      %114 = vmatprep.subr.mxu0 0.0
      %115 = vmatpush1.msra.mxu0 0.0
      %116 = vmatprep.subr.mxu0 0.0
      %117 = vmatpush1.msra.mxu0 0.0
      %118 = vmatprep.subr.mxu0 0.0
      %119 = vmatpush1.msra.mxu0 0.0
      %120 = vmatprep.subr.mxu0 0.0
      %121 = vmatpush1.msra.mxu0 0.0
      %122 = vmatprep.subr.mxu0 0.0
      %123 = vmatpush1.msra.mxu0 0.0
      %124 = vmatprep.subr.mxu0 0.0
      %125 = vmatpush1.msra.mxu0 0.0
      %126 = vmatprep.subr.mxu0 0.0
      %127 = vmatpush1.msra.mxu0 0.0
      %128 = vmatprep.subr.mxu0 0.0
      %129 = vmatpush1.msra.mxu0 0.0
      %130 = vmatprep.subr.mxu0 0.0
      %131 = vmatpush1.msra.mxu0 0.0
      %132 = vmatprep.subr.mxu0 0.0
      %133 = vmatpush1.msra.mxu0 0.0
      %134 = vmatprep.subr.mxu0 0.0
      %135 = vmatpush1.msra.mxu0 0.0
      %136 = vmatprep.subr.mxu0 0.0
      %137 = vmatpush1.msra.mxu0 0.0
      %138 = vmatprep.subr.mxu0 0.0
      %139 = vmatpush1.msra.mxu0 0.0
      %140 = vmatprep.subr.mxu0 0.0
      %141 = vmatpush1.msra.mxu0 0.0
      %142 = vmatprep.subr.mxu0 0.0
      %143 = vmatpush1.msra.mxu0 0.0
      %144 = vmatprep.subr.mxu0 0.0
      %145 = vmatpush1.msra.mxu0 0.0
      %146 = vmatprep.subr.mxu0 0.0
      %147 = vmatpush1.msra.mxu0 0.0
      %148 = vmatprep.subr.mxu0 0.0
      %149 = vmatpush1.msra.mxu0 0.0
      %150 = vmatprep.subr.mxu0 0.0
      %151 = vmatpush1.msra.mxu0 0.0
      %152 = vmatprep.subr.mxu0 0.0
      %153 = vmatpush1.msra.mxu0 0.0
      %154 = vmatprep.subr.mxu0 0.0
      %155 = vmatpush1.msra.mxu0 0.0
      %156 = vmatprep.subr.mxu0 0.0
      %157 = vmatpush1.msra.mxu0 0.0
      %158 = vmatprep.subr.mxu0 0.0
      %159 = vmatpush1.msra.mxu0 0.0
      %160 = vmatprep.subr.mxu0 0.0
      %161 = vmatpush1.msra.mxu0 0.0
      %162 = vmatprep.subr.mxu0 0.0
      %163 = vmatpush1.msra.mxu0 0.0
      %164 = vmatprep.subr.mxu0 0.0
      %165 = vmatpush1.msra.mxu0 0.0
      %166 = vmatprep.subr.mxu0 0.0
      %167 = vmatpush1.msra.mxu0 0.0
      %168 = vmatprep.mubr.f32.mxu0 0.0
      %169 = vmatmul.mubr.f32.gmra.mrb[0].mxu0 %v99
      %v170 = vpop.f32.mrb[0].mxu0
      %v171 = vadd.f32 %v95, %v170
      %v172 = vpop.f32.mrb[0].mxu0
      %173 = vdwg.mxu0
      %174 = vst [vmem:[#allocation8] sm:$0x3] %v171
    $region29: #{tpu_custom_call.1} parent=1 // pred_fallthru
      _
    // Predicated region
    $region30: #{tpu_custom_call.1} parent=1 // pred_check
      _
    $region31: #{tpu_custom_call.1} parent=1 // pred_check_branch
      %176 = sbr.rel (0) target = $region33
    $region32: #{tpu_custom_call.1} parent=1 // pred_region
      %s178 = ssub.s32 32, 32
      %179 = vsyncadd [#allocation5], %s178
      %s181 = sshll.u32 [#allocation8], 4
      %s182 = int_to_ptr.vmem [resolvable:$true] %s181
      %184 = dma.vmem_to_hbm [thread:$0]  %s182, 32, %s3, [#allocation5]
    $region33: #{tpu_custom_call.1} parent=1 // pred_fallthru
      _
    // Predicated region
    $region34: #{tpu_custom_call.1} parent=1 // pred_check
      _
    $region35: #{tpu_custom_call.1} parent=1 // pred_check_branch
      %186 = sbr.rel (0) target = $region37
    $region36: #{tpu_custom_call.1} parent=1 // pred_region
      %187 = dma.done [#allocation5], 32
    $region37: #{tpu_custom_call.1} parent=1 // pred_fallthru
      _
    %188 = vsyncpa [#allocation4], 1
    %189 = vsyncpa [#allocation7], 1
    %190 = vsyncpa [#allocation5], 1

</llo_original>
